<compile_context>
chip_gen: v7x
topology: tpu7x:2x2x1
jax: 0.10.0
libtpu: 0.0.40
codegen_flags: <defaults>
</compile_context>

<pallas_src>
import functools

import jax
import jax.numpy as jnp
from jax import lax
from jax.experimental import pallas as pl
from jax.experimental.pallas import tpu as pltpu

MIN_VAL = 1e-8


def _mixed_contrastive_kernel(sel_ref, diag_col_ref, diag_row_ref, vid_ref,
                              w_ref, txt_ref, lt_ref, li_ref, *,
                              margin, matmul_dtype):
    """One row-tile of the score matrix.

    sel_ref:      (E, E*D)  one-hot expert->lane selection (resident)
    diag_col_ref: (tm, 1)   global score diagonal, this tile's rows
    diag_row_ref: (1, B)    global score diagonal (resident)
    vid_ref:      (tm, E*D) video embeddings, expert-flattened
    w_ref:        (tm, E)   per-sample expert mixture weights
    txt_ref:      (B, E*D)  gated text embeddings, expert-flattened (resident)
    lt_ref:       (tm, 1)   row sums of clamped loss_txt (diag term included)
    li_ref:       (1, B)    partial column sums of clamped loss_img
    """
    v = vid_ref[...]                       # [tm, ED] f32
    t = txt_ref[...]                       # [B, ED]  f32
    w = w_ref[...]                         # [tm, E]  f32
    sel = sel_ref[...]                     # [E, ED]  f32 one-hot
    d1 = diag_col_ref[...]                 # [tm, 1]
    d2 = diag_row_ref[...]                 # [1, B]

    # w_full[i, k] = w[i, k // D]: tiny one-hot MXU matmul — lane-dense, no
    # in-kernel reshape, keeps the VALU slot free for the epilogue.
    w_full = jnp.dot(w, sel, preferred_element_type=jnp.float32)      # [tm, ED]

    # One MXU matmul over the folded contraction K = E*D:
    #   scores[i, j] = sum_{e,d} w[i,e] * vid[i,e,d] * txt[j,e,d]
    lhs = (v * w_full).astype(matmul_dtype)
    rhs = t.astype(matmul_dtype)
    scores = lax.dot_general(
        lhs, rhs,
        dimension_numbers=(((1,), (1,)), ((), ())),
        preferred_element_type=jnp.float32)                           # [tm, B]

    # Slim epilogue: no eye mask, no in-kernel diagonal extraction. The diagonal
    # contributes exactly max(margin, MIN_VAL) to each row/column sum, which the
    # wrapper subtracts once per row / per column.
    m = margin + scores
    lt_ref[...] = jnp.sum(jnp.maximum(m - d1, MIN_VAL), axis=1, keepdims=True)
    li_ref[...] = jnp.sum(jnp.maximum(m - d2, MIN_VAL), axis=0, keepdims=True)


def _vmem_budget_bytes():
    # Generation-aware scoped-VMEM budget (v7x: 64 MiB physical, v5e/v6e: 128 MiB).
    try:
        cap = pltpu.get_tpu_info().vmem_capacity_bytes
    except Exception:
        cap = 64 * 1024 * 1024
    return (int(cap) * 3) // 4


def _pick_row_tile(batch, budget_bytes):
    """Largest row tile whose score stripe (+ epilogue temps) fits ~half the budget."""
    if batch <= 512:
        return batch
    for tm in (1024, 512, 256, 128):
        if batch % tm:
            continue
        if 3 * tm * batch * 4 <= budget_bytes // 2:
            return tm
    # TODO(synk): pad ragged production batches to a multiple of 128.
    return 128 if batch % 128 == 0 else batch


def mixed_contrastive_pallas(vid_flat, txt_flat, w, diag, margin, *,
                             n_experts, d_per_expert, row_tile=None,
                             matmul_dtype=jnp.float32):
    """vid_flat/txt_flat: [B, E*D] f32; w: [B, E] f32; diag: [B] f32 -> loss [B]."""
    B, ED = vid_flat.shape
    budget = _vmem_budget_bytes()
    tm = _pick_row_tile(B, budget) if row_tile is None else row_tile
    assert B % tm == 0, "row tile must divide the batch"
    num_tiles = B // tm

    # One-hot expert->lane selection matrix (constant, resident in VMEM).
    lane_expert = jnp.arange(ED, dtype=jnp.int32) // d_per_expert
    sel = (lane_expert[None, :] ==
           jnp.arange(n_experts, dtype=jnp.int32)[:, None]).astype(jnp.float32)

    diag_col = diag.reshape(B, 1)
    diag_row = diag.reshape(1, B)

    kernel = functools.partial(_mixed_contrastive_kernel, margin=margin,
                               matmul_dtype=matmul_dtype)
    lt, li = pl.pallas_call(
        kernel,
        out_shape=(
            jax.ShapeDtypeStruct((B, 1), jnp.float32),          # loss_txt row sums
            jax.ShapeDtypeStruct((num_tiles, B), jnp.float32),  # loss_img partial col sums
        ),
        grid_spec=pltpu.PrefetchScalarGridSpec(
            num_scalar_prefetch=0,
            grid=(num_tiles,),
            in_specs=[
                pl.BlockSpec((n_experts, ED), lambda i: (0, 0)),   # sel (resident)
                pl.BlockSpec((tm, 1), lambda i: (i, 0)),           # diag column tile
                pl.BlockSpec((1, B), lambda i: (0, 0)),            # diag row (resident)
                pl.BlockSpec((tm, ED), lambda i: (i, 0)),          # vid row tile
                pl.BlockSpec((tm, n_experts), lambda i: (i, 0)),   # w row tile
                pl.BlockSpec((B, ED), lambda i: (0, 0)),           # txt (resident)
            ],
            out_specs=(
                pl.BlockSpec((tm, 1), lambda i: (i, 0)),
                pl.BlockSpec((1, B), lambda i: (i, 0)),
            ),
        ),
        compiler_params=pltpu.CompilerParams(
            dimension_semantics=("parallel",),
            vmem_limit_bytes=budget,
        ),
    )(sel, diag_col, diag_row, vid_flat, w, txt_flat)

    # Every row/column sum includes exactly one diagonal term = max(margin, MIN_VAL).
    diag_term = max(margin, MIN_VAL)
    inv_b = 1.0 / B
    loss = (lt[:, 0] - diag_term) * inv_b + (jnp.sum(li, axis=0) - diag_term) * inv_b
    return loss


def init_params(key, sem_dim, n_experts, expert_dim):
    ks = jax.random.split(key, 3)
    scale = 0.05
    return {
        # weight_predictor: Linear(sem_dim, n_experts) + Softmax
        "wp_w": jax.random.normal(ks[0], (sem_dim, n_experts), jnp.float32) * scale,
        "wp_b": jnp.zeros((n_experts,), jnp.float32),
        # GatedEmbedding (per expert): Linear(sem_dim, D) + context gate Linear(D, D)
        "ge_w1": jax.random.normal(ks[1], (n_experts, sem_dim, expert_dim), jnp.float32) * scale,
        "ge_b1": jnp.zeros((n_experts, expert_dim), jnp.float32),
        "ge_w2": jax.random.normal(ks[2], (n_experts, expert_dim, expert_dim), jnp.float32) * scale,
        "ge_b2": jnp.zeros((n_experts, expert_dim), jnp.float32),
    }


def mixed_contrastive_forward(params, vid, txt, margin=0.2):
    """vid: [B, E, D], txt: [B, sem_dim] -> (loss [B], w [B, E])."""
    B, E, D = vid.shape
    # weight_predictor (glue, tiny)
    w = jax.nn.softmax(txt @ params["wp_w"] + params["wp_b"], axis=-1)      # [B, E]
    # gated_emb (glue, tiny), emitted directly in [B, E, D] layout so the flatten
    # below is a zero-copy view (no HBM transpose).
    h = jnp.einsum("bs,esd->bed", txt, params["ge_w1"]) + params["ge_b1"][None, :, :]
    g = jnp.einsum("bed,edf->bef", h, params["ge_w2"]) + params["ge_b2"][None, :, :]
    h = h * jax.nn.sigmoid(g)
    h = h / jnp.maximum(jnp.linalg.norm(h, axis=-1, keepdims=True), 1e-12)  # [B, E, D]

    vid_f32 = vid.astype(jnp.float32)
    txt_f32 = h.astype(jnp.float32)
    w_f32 = w.astype(jnp.float32)

    # Global score diagonal, precomputed once (tiny fused elementwise+reduce):
    # removes the in-kernel diag/eye work and is required once the score matrix
    # is row-tiled (a row tile cannot see the full diagonal for the column term).
    diag = jnp.einsum("be,bed,bed->b", w_f32, vid_f32, txt_f32)             # [B]

    # Hot path in Pallas: contiguous [B, E, D] -> [B, E*D] reshapes are free views.
    vid_flat = vid_f32.reshape(B, E * D)
    txt_flat = txt_f32.reshape(B, E * D)
    loss = mixed_contrastive_pallas(vid_flat, txt_flat, w_f32, diag, margin,
                                    n_experts=E, d_per_expert=D)
    return loss, w


def _reference(params, vid, txt, margin=0.2):
    """Pure-JAX reference mirroring the PyTorch forward."""
    w = jax.nn.softmax(txt @ params["wp_w"] + params["wp_b"], axis=-1)
    h = jnp.einsum("bs,esd->bed", txt, params["ge_w1"]) + params["ge_b1"][None, :, :]
    g = jnp.einsum("bed,edf->bef", h, params["ge_w2"]) + params["ge_b2"][None, :, :]
    h = h * jax.nn.sigmoid(g)
    h = h / jnp.maximum(jnp.linalg.norm(h, axis=-1, keepdims=True), 1e-12)
    scores = jnp.einsum("ie,ied,jed->ij", w, vid, h)
    b = scores.shape[0]
    diag = jnp.diag(scores)[:, None]
    eye = jnp.eye(b, dtype=bool)
    loss_txt = jnp.where(eye, 0.0, jnp.maximum(margin + scores - diag, MIN_VAL))
    loss_img = jnp.where(eye, 0.0, jnp.maximum(margin + scores - diag.T, MIN_VAL))
    return loss_txt.mean(1) + loss_img.mean(0), w


if __name__ == "__main__":
    B, E, D, SEM = 8, 4, 32, 32   # E*D = 128 -> lane-dense folded contraction
    MARGIN = 0.2

    key = jax.random.PRNGKey(0)
    k_vid, k_txt, k_par = jax.random.split(key, 3)
    vid = jax.random.normal(k_vid, (B, E, D), jnp.float32)
    txt = jax.random.normal(k_txt, (B, SEM), jnp.float32)
    params = init_params(k_par, SEM, E, D)

    fwd = jax.jit(functools.partial(mixed_contrastive_forward, margin=MARGIN))
    loss, w = fwd(params, vid, txt)
    jax.block_until_ready((loss, w))

    loss_ref, w_ref = _reference(params, vid, txt, MARGIN)
    assert loss.shape == (B,) and w.shape == (B, E)
    assert jnp.allclose(loss, loss_ref, atol=1e-4, rtol=1e-4)
    assert jnp.allclose(w, w_ref, atol=1e-5, rtol=1e-5)

    print("KERNEL_OK")
</pallas_src>

<mosaic_0001>
module attributes {stable_mosaic.version = 11 : i64} {
  func.func @_mixed_contrastive_kernel(%arg0: i32, %arg1: memref<4x128xf32, #tpu.memory_space<vmem>>, %arg2: memref<8x1xf32, #tpu.memory_space<vmem>>, %arg3: memref<1x8xf32, #tpu.memory_space<vmem>>, %arg4: memref<8x128xf32, #tpu.memory_space<vmem>>, %arg5: memref<8x4xf32, #tpu.memory_space<vmem>>, %arg6: memref<8x128xf32, #tpu.memory_space<vmem>>, %arg7: memref<8x1xf32, #tpu.memory_space<vmem>>, %arg8: memref<1x8xf32, #tpu.memory_space<vmem>>) attributes {dimension_semantics = [#tpu.dimension_semantics<parallel>], iteration_bounds = array<i64: 1>, scalar_prefetch = 0 : i64, scratch_operands = 0 : i64, tpu.core_type = #tpu.core_type<tc>, window_params = [{pipeline_mode = #tpu.pipeline_mode<synchronous>, transform_indices = @transform_0, window_bounds = array<i64: 4, 128>}, {transform_indices = @transform_1, window_bounds = array<i64: 8, 1>}, {pipeline_mode = #tpu.pipeline_mode<synchronous>, transform_indices = @transform_2, window_bounds = array<i64: 1, 8>}, {transform_indices = @transform_3, window_bounds = array<i64: 8, 128>}, {transform_indices = @transform_4, window_bounds = array<i64: 8, 4>}, {pipeline_mode = #tpu.pipeline_mode<synchronous>, transform_indices = @transform_5, window_bounds = array<i64: 8, 128>}, {transform_indices = @transform_6, window_bounds = array<i64: 8, 1>}, {transform_indices = @transform_7, window_bounds = array<i64: 1, 8>}]} {
    %c0 = arith.constant 0 : index
    %c0_0 = arith.constant 0 : index
    %0 = vector.load %arg4[%c0, %c0_0] : memref<8x128xf32, #tpu.memory_space<vmem>>, vector<8x128xf32>
    %c0_1 = arith.constant 0 : index
    %c0_2 = arith.constant 0 : index
    %1 = vector.load %arg6[%c0_1, %c0_2] : memref<8x128xf32, #tpu.memory_space<vmem>>, vector<8x128xf32>
    %c0_3 = arith.constant 0 : index
    %c0_4 = arith.constant 0 : index
    %2 = vector.load %arg5[%c0_3, %c0_4] : memref<8x4xf32, #tpu.memory_space<vmem>>, vector<8x4xf32>
    %c0_5 = arith.constant 0 : index
    %c0_6 = arith.constant 0 : index
    %3 = vector.load %arg1[%c0_5, %c0_6] : memref<4x128xf32, #tpu.memory_space<vmem>>, vector<4x128xf32>
    %c0_7 = arith.constant 0 : index
    %c0_8 = arith.constant 0 : index
    %4 = vector.load %arg2[%c0_7, %c0_8] : memref<8x1xf32, #tpu.memory_space<vmem>>, vector<8x1xf32>
    %c0_9 = arith.constant 0 : index
    %c0_10 = arith.constant 0 : index
    %5 = vector.load %arg3[%c0_9, %c0_10] : memref<1x8xf32, #tpu.memory_space<vmem>>, vector<1x8xf32>
    %cst = arith.constant dense<0.000000e+00> : vector<8x128xf32>
    %6 = tpu.matmul %2, %3, %cst {dimension_numbers = #tpu.dot_dimension_numbers<[1], [0], [0], [1], [0, 0, 1, 1], [], []>} : vector<8x4xf32>, vector<4x128xf32>, vector<8x128xf32> -> vector<8x128xf32>
    %7 = arith.mulf %0, %6 : vector<8x128xf32>
    %cst_11 = arith.constant dense<0.000000e+00> : vector<8x8xf32>
    %8 = tpu.matmul %7, %1, %cst_11 {dimension_numbers = #tpu.dot_dimension_numbers<[1], [1], [0], [0], [0, 0, 1, 0], [], []>} : vector<8x128xf32>, vector<8x128xf32>, vector<8x8xf32> -> vector<8x8xf32>
    %cst_12 = arith.constant 2.000000e-01 : f32
    %9 = vector.broadcast %cst_12 : f32 to vector<8x8xf32>
    %10 = arith.addf %9, %8 : vector<8x8xf32>
    %11 = vector.broadcast %4 : vector<8x1xf32> to vector<8x8xf32>
    %12 = arith.subf %10, %11 : vector<8x8xf32>
    %cst_13 = arith.constant 9.99999993E-9 : f32
    %13 = vector.broadcast %cst_13 : f32 to vector<8x8xf32>
    %14 = arith.maximumf %12, %13 : vector<8x8xf32>
    %cst_14 = arith.constant dense<0.000000e+00> : vector<8xf32>
    %15 = vector.multi_reduction <add>, %14, %cst_14 [1] : vector<8x8xf32> to vector<8xf32>
    %16 = vector.shape_cast %15 : vector<8xf32> to vector<8x1xf32>
    %c0_15 = arith.constant 0 : index
    %c0_16 = arith.constant 0 : index
    %17 = vector.load %arg7[%c0_15, %c0_16] : memref<8x1xf32, #tpu.memory_space<vmem>>, vector<8x1xf32>
    tpu.vector_store %arg7[%c0_15, %c0_16], %16 {strides = array<i32>} : memref<8x1xf32, #tpu.memory_space<vmem>>, vector<8x1xf32>,
    %18 = vector.broadcast %5 : vector<1x8xf32> to vector<8x8xf32>
    %19 = arith.subf %10, %18 : vector<8x8xf32>
    %cst_17 = arith.constant 9.99999993E-9 : f32
    %20 = vector.broadcast %cst_17 : f32 to vector<8x8xf32>
    %21 = arith.maximumf %19, %20 : vector<8x8xf32>
    %cst_18 = arith.constant dense<0.000000e+00> : vector<8xf32>
    %22 = vector.multi_reduction <add>, %21, %cst_18 [0] : vector<8x8xf32> to vector<8xf32>
    %23 = vector.shape_cast %22 : vector<8xf32> to vector<1x8xf32>
    %c0_19 = arith.constant 0 : index
    %c0_20 = arith.constant 0 : index
    %24 = vector.load %arg8[%c0_19, %c0_20] : memref<1x8xf32, #tpu.memory_space<vmem>>, vector<1x8xf32>
    tpu.vector_store %arg8[%c0_19, %c0_20], %23 {strides = array<i32>} : memref<1x8xf32, #tpu.memory_space<vmem>>, vector<1x8xf32>,
    return
  }
  func.func @transform_0(%arg0: i32) -> (i32, i32) {
    %c0_i32 = arith.constant 0 : i32
    %c0_i32_0 = arith.constant 0 : i32
    %c0_i32_1 = arith.constant 0 : i32
    return %c0_i32, %c0_i32_0 : i32, i32
  }
  func.func @transform_1(%arg0: i32) -> (i32, i32) {
    %c0_i32 = arith.constant 0 : i32
    %c0_i32_0 = arith.constant 0 : i32
    return %arg0, %c0_i32 : i32, i32
  }
  func.func @transform_2(%arg0: i32) -> (i32, i32) {
    %c0_i32 = arith.constant 0 : i32
    %c0_i32_0 = arith.constant 0 : i32
    %c0_i32_1 = arith.constant 0 : i32
    return %c0_i32, %c0_i32_0 : i32, i32
  }
  func.func @transform_3(%arg0: i32) -> (i32, i32) {
    %c0_i32 = arith.constant 0 : i32
    %c0_i32_0 = arith.constant 0 : i32
    return %arg0, %c0_i32 : i32, i32
  }
  func.func @transform_4(%arg0: i32) -> (i32, i32) {
    %c0_i32 = arith.constant 0 : i32
    %c0_i32_0 = arith.constant 0 : i32
    return %arg0, %c0_i32 : i32, i32
  }
  func.func @transform_5(%arg0: i32) -> (i32, i32) {
    %c0_i32 = arith.constant 0 : i32
    %c0_i32_0 = arith.constant 0 : i32
    %c0_i32_1 = arith.constant 0 : i32
    return %c0_i32, %c0_i32_0 : i32, i32
  }
  func.func @transform_6(%arg0: i32) -> (i32, i32) {
    %c0_i32 = arith.constant 0 : i32
    %c0_i32_0 = arith.constant 0 : i32
    return %arg0, %c0_i32 : i32, i32
  }
  func.func @transform_7(%arg0: i32) -> (i32, i32) {
    %c0_i32 = arith.constant 0 : i32
    %c0_i32_0 = arith.constant 0 : i32
    return %arg0, %c0_i32 : i32, i32
  }
}

</mosaic_0001>

<llo_original>
// kernel: mixed_contrastive_forward.1
$region0: #{mixed_contrastive_forward.1}
  #allocation0 [shape = 'u32[]', space=smem, size = 0x4, offset = 0x4, fixed_abs, tag = 'smem constant byte address 0x4 - core index']
  #allocation1 [shape = 'u32[144,128]{1,0:T(1,128)}', space=vmem, size = 0x12000, scoped, tag = 'internal scratch']
  %s0 = inlined_call_operand.vmem [shape: f32[4,128], index: 0, kind: input, shape index: {}]
  %s1 = inlined_call_operand.vmem [shape: f32[8,1], index: 1, kind: input, shape index: {}]
  %s2 = inlined_call_operand.vmem [shape: f32[1,8], index: 2, kind: input, shape index: {}]
  %s3 = inlined_call_operand.vmem [shape: f32[8,128], index: 3, kind: input, shape index: {}]
  %s4 = inlined_call_operand.vmem [shape: f32[8,4], index: 4, kind: input, shape index: {}]
  %s5 = inlined_call_operand.vmem [shape: f32[8,128], index: 5, kind: input, shape index: {}]
  %s6 = inlined_call_operand.vmem [shape: f32[8,1], index: 6, kind: output, shape index: {0}]
  %s7 = inlined_call_operand.vmem [shape: f32[1,8], index: 7, kind: output, shape index: {1}]
  %8 = xla_tuple %s6, %s7
  %s9 = sld [smem:[#allocation0]]
  $region42: #{mixed_contrastive_forward.1} parent=0
    _
  %s11 = ssub.s32 1, %s9
  %s12 = scalar_select 0, %s11, %s9
  // Predicated region
  $region2: #{mixed_contrastive_forward.1} parent=0 // pred_check
    _
  $region3: #{mixed_contrastive_forward.1} parent=0 // pred_check_branch
    %14 = sbr.rel (0) target = $region5
  $region4: #{mixed_contrastive_forward.1} parent=0 // pred_region
    _
  $region5: #{mixed_contrastive_forward.1} parent=0 // pred_fallthru
    _
  // Predicated region
  $region6: #{mixed_contrastive_forward.1} parent=0 // pred_check
    _
  $region7: #{mixed_contrastive_forward.1} parent=0 // pred_check_branch
    %16 = sbr.rel (0) target = $region9
  $region8: #{mixed_contrastive_forward.1} parent=0 // pred_region
    _
  $region9: #{mixed_contrastive_forward.1} parent=0 // pred_fallthru
    _
  // Predicated region
  $region10: #{mixed_contrastive_forward.1} parent=0 // pred_check
    _
  $region11: #{mixed_contrastive_forward.1} parent=0 // pred_check_branch
    %18 = sbr.rel (0) target = $region13
  $region12: #{mixed_contrastive_forward.1} parent=0 // pred_region
    _
  $region13: #{mixed_contrastive_forward.1} parent=0 // pred_fallthru
    _
  // Predicated region
  $region14: #{mixed_contrastive_forward.1} parent=0 // pred_check
    _
  $region15: #{mixed_contrastive_forward.1} parent=0 // pred_check_branch
    %20 = sbr.rel (0) target = $region17
  $region16: #{mixed_contrastive_forward.1} parent=0 // pred_region
    _
  $region17: #{mixed_contrastive_forward.1} parent=0 // pred_fallthru
    _
  // Predicated region
  $region18: #{mixed_contrastive_forward.1} parent=0 // pred_check
    _
  $region19: #{mixed_contrastive_forward.1} parent=0 // pred_check_branch
    %22 = sbr.rel (0) target = $region21
  $region20: #{mixed_contrastive_forward.1} parent=0 // pred_region
    _
  $region21: #{mixed_contrastive_forward.1} parent=0 // pred_fallthru
    _
  // Predicated region
  $region22: #{mixed_contrastive_forward.1} parent=0 // pred_check
    _
  $region23: #{mixed_contrastive_forward.1} parent=0 // pred_check_branch
    %24 = sbr.rel (0) target = $region25
  $region24: #{mixed_contrastive_forward.1} parent=0 // pred_region
    _
  $region25: #{mixed_contrastive_forward.1} parent=0 // pred_fallthru
    _
  %v25 = vld [vmem:[%s3] sm:$0xff]
  %v26 = vld [vmem:[%s5] sm:$0xff]
  %v27 = vld [vmem:[%s4] sm:$0xff]
  %v28 = vld [vmem:[%s0] sm:$0xf]
  %v29 = vld [vmem:[%s1] sm:$0xff]
  %v30 = vld [vmem:[%s2] sm:$0x1]
  %vm31 = vcmask 31744
  %v33 = vsel %vm31, %v27, 0
  %vm35 = vcmask 1043456
  %v37 = vsel %vm35, %v28, 0
  %39 = vmatprep.subr.mxu0 0.0
  %40 = vmatpush1.msra.mxu0 %v37
  %41 = vmatprep.subr.mxu0 0.0
  %42 = vmatpush1.msra.mxu0 0.0
  %43 = vmatprep.subr.mxu0 0.0
  %44 = vmatpush1.msra.mxu0 0.0
  %45 = vmatprep.subr.mxu0 0.0
  %46 = vmatpush1.msra.mxu0 0.0
  %47 = vmatprep.subr.mxu0 0.0
  %48 = vmatpush1.msra.mxu0 0.0
  %49 = vmatprep.subr.mxu0 0.0
  %50 = vmatpush1.msra.mxu0 0.0
  %51 = vmatprep.subr.mxu0 0.0
  %52 = vmatpush1.msra.mxu0 0.0
  %53 = vmatprep.subr.mxu0 0.0
  %54 = vmatpush1.msra.mxu0 0.0
  %55 = vmatprep.subr.mxu0 0.0
  %56 = vmatpush1.msra.mxu0 0.0
  %57 = vmatprep.subr.mxu0 0.0
  %58 = vmatpush1.msra.mxu0 0.0
  %59 = vmatprep.subr.mxu0 0.0
  %60 = vmatpush1.msra.mxu0 0.0
  %61 = vmatprep.subr.mxu0 0.0
  %62 = vmatpush1.msra.mxu0 0.0
  %63 = vmatprep.subr.mxu0 0.0
  %64 = vmatpush1.msra.mxu0 0.0
  %65 = vmatprep.subr.mxu0 0.0
  %66 = vmatpush1.msra.mxu0 0.0
  %67 = vmatprep.subr.mxu0 0.0
  %68 = vmatpush1.msra.mxu0 0.0
  %69 = vmatprep.subr.mxu0 0.0
  %70 = vmatpush1.msra.mxu0 0.0
  %71 = vmatprep.subr.mxu0 0.0
  %72 = vmatpush1.msra.mxu0 0.0
  %73 = vmatprep.subr.mxu0 0.0
  %74 = vmatpush1.msra.mxu0 0.0
  %75 = vmatprep.subr.mxu0 0.0
  %76 = vmatpush1.msra.mxu0 0.0
  %77 = vmatprep.subr.mxu0 0.0
  %78 = vmatpush1.msra.mxu0 0.0
  %79 = vmatprep.subr.mxu0 0.0
  %80 = vmatpush1.msra.mxu0 0.0
  %81 = vmatprep.subr.mxu0 0.0
  %82 = vmatpush1.msra.mxu0 0.0
  %83 = vmatprep.subr.mxu0 0.0
  %84 = vmatpush1.msra.mxu0 0.0
  %85 = vmatprep.subr.mxu0 0.0
  %86 = vmatpush1.msra.mxu0 0.0
  %87 = vmatprep.subr.mxu0 0.0
  %88 = vmatpush1.msra.mxu0 0.0
  %89 = vmatprep.subr.mxu0 0.0
  %90 = vmatpush1.msra.mxu0 0.0
  %91 = vmatprep.subr.mxu0 0.0
  %92 = vmatpush1.msra.mxu0 0.0
  %93 = vmatprep.subr.mxu0 0.0
  %94 = vmatpush1.msra.mxu0 0.0
  %95 = vmatprep.subr.mxu0 0.0
  %96 = vmatpush1.msra.mxu0 0.0
  %97 = vmatprep.subr.mxu0 0.0
  %98 = vmatpush1.msra.mxu0 0.0
  %99 = vmatprep.subr.mxu0 0.0
  %100 = vmatpush1.msra.mxu0 0.0
  %101 = vmatprep.subr.mxu0 0.0
  %102 = vmatpush1.msra.mxu0 0.0
  %103 = vmatprep.mubr.f32.mxu0 0.0
  %104 = vmatmul.mubr.f32.gmra.mrb[0].mxu0 %v33
  %v105 = vpop.f32.mrb[0].mxu0
  %v106 = vadd.f32 0.0, %v105
  %v107 = vpop.f32.mrb[0].mxu0
  %108 = vdwg.mxu0
  %v109 = vmul.f32 %v25, %v106
  %110 = vmatprep.subr.mxu0 0.0
  %111 = vmatpush1.xpose.msra.mxu0 %v26
  %112 = vmatprep.subr.mxu0 0.0
  %113 = vmatpush1.xpose.msra.mxu0 0.0
  %114 = vmatprep.subr.mxu0 0.0
  %115 = vmatpush1.xpose.msra.mxu0 0.0
  %116 = vmatprep.subr.mxu0 0.0
  %117 = vmatpush1.xpose.msra.mxu0 0.0
  %118 = vmatprep.subr.mxu0 0.0
  %119 = vmatpush1.xpose.msra.mxu0 0.0
  %120 = vmatprep.subr.mxu0 0.0
  %121 = vmatpush1.xpose.msra.mxu0 0.0
  %122 = vmatprep.subr.mxu0 0.0
  %123 = vmatpush1.xpose.msra.mxu0 0.0
  %124 = vmatprep.subr.mxu0 0.0
  %125 = vmatpush1.xpose.msra.mxu0 0.0
  %126 = vmatprep.subr.mxu0 0.0
  %127 = vmatpush1.xpose.msra.mxu0 0.0
  %128 = vmatprep.subr.mxu0 0.0
  %129 = vmatpush1.xpose.msra.mxu0 0.0
  %130 = vmatprep.subr.mxu0 0.0
  %131 = vmatpush1.xpose.msra.mxu0 0.0
  %132 = vmatprep.subr.mxu0 0.0
  %133 = vmatpush1.xpose.msra.mxu0 0.0
  %134 = vmatprep.subr.mxu0 0.0
  %135 = vmatpush1.xpose.msra.mxu0 0.0
  %136 = vmatprep.subr.mxu0 0.0
  %137 = vmatpush1.xpose.msra.mxu0 0.0
  %138 = vmatprep.subr.mxu0 0.0
  %139 = vmatpush1.xpose.msra.mxu0 0.0
  %140 = vmatprep.subr.mxu0 0.0
  %141 = vmatpush1.xpose.msra.mxu0 0.0
  %142 = vmatprep.subr.mxu0 0.0
  %143 = vmatpush1.xpose.msra.mxu0 0.0
  %144 = vmatprep.subr.mxu0 0.0
  %145 = vmatpush1.xpose.msra.mxu0 0.0
  %146 = vmatprep.subr.mxu0 0.0
  %147 = vmatpush1.xpose.msra.mxu0 0.0
  %148 = vmatprep.subr.mxu0 0.0
  %149 = vmatpush1.xpose.msra.mxu0 0.0
  %150 = vmatprep.subr.mxu0 0.0
  %151 = vmatpush1.xpose.msra.mxu0 0.0
  %152 = vmatprep.subr.mxu0 0.0
  %153 = vmatpush1.xpose.msra.mxu0 0.0
  %154 = vmatprep.subr.mxu0 0.0
  %155 = vmatpush1.xpose.msra.mxu0 0.0
  %156 = vmatprep.subr.mxu0 0.0
  %157 = vmatpush1.xpose.msra.mxu0 0.0
  %158 = vmatprep.subr.mxu0 0.0
  %159 = vmatpush1.xpose.msra.mxu0 0.0
  %160 = vmatprep.subr.mxu0 0.0
  %161 = vmatpush1.xpose.msra.mxu0 0.0
  %162 = vmatprep.subr.mxu0 0.0
  %163 = vmatpush1.xpose.msra.mxu0 0.0
  %164 = vmatprep.subr.mxu0 0.0
  %165 = vmatpush1.xpose.msra.mxu0 0.0
  %166 = vmatprep.subr.mxu0 0.0
  %167 = vmatpush1.xpose.msra.mxu0 0.0
  %168 = vmatprep.subr.mxu0 0.0
  %169 = vmatpush1.xpose.msra.mxu0 0.0
  %170 = vmatprep.subr.mxu0 0.0
  %171 = vmatpush1.xpose.msra.mxu0 0.0
  %172 = vmatprep.subr.mxu0 0.0
  %173 = vmatpush1.xpose.msra.mxu0 0.0
  %174 = vmatprep.mubr.f32.mxu0 0.0
  %175 = vmatmul.mubr.f32.gmra.mrb[0].mxu0 %v109
  %v176 = vpop.f32.mrb[0].mxu0
  %v177 = vadd.f32 0.2, %v176
  %v178 = vpop.f32.mrb[0].mxu0
  %179 = vdwg.mxu0
  %181 = vset.pattern.permute.xlu0 0
  %182 = vperm.xlu0 %181, %v29
  %v183 = vpop.permute.xlu0 %182
  %v185 = vsub.f32 %v177, %v183
  %v186 = vmax.f32 %v185, 1e-08
  %vm187 = vcmask 64512
  %v188 = vsel %vm187, %v186, 0.0
  %189 = vadd.xlane.f32.xlu0 %v188
  %v190 = vpop.xlane.xlu0 %189
  %vm191 = vcmask 7168
  %192 = vst.msk [vmem:[%s6] sm:$0xff] %vm191, %v190
  %v194 = vlaneseq
  %v195 = vshrl.u32 %v194, 7
  %v196 = vsub.s32 0, %v195
  %v197 = vrot.slane %v30, %v196
  %v199 = vsub.f32 %v177, %v197
  %v200 = vmax.f32 %v199, 1e-08
  %v201 = vsel %vm187, %v200, 0.0
  %v202 = vrot.slane %v201, 4
  %v203 = vadd.f32 %v201, %v202
  %v204 = vrot.slane %v203, 2
  %v205 = vadd.f32 %v203, %v204
  %v206 = vrot.slane %v205, 1
  %v207 = vadd.f32 %v205, %v206
  %vm208 = vcmask 57344
  %209 = vst.msk [vmem:[%s7] sm:$0x1] %vm208, %v207
  // Predicated region
  $region26: #{mixed_contrastive_forward.1} parent=0 // pred_check
    _
  $region27: #{mixed_contrastive_forward.1} parent=0 // pred_check_branch
    %211 = sbr.rel (0) target = $region29
  $region28: #{mixed_contrastive_forward.1} parent=0 // pred_region
    _
  $region29: #{mixed_contrastive_forward.1} parent=0 // pred_fallthru
    _
  // Predicated region
  $region30: #{mixed_contrastive_forward.1} parent=0 // pred_check
    _
  $region31: #{mixed_contrastive_forward.1} parent=0 // pred_check_branch
    %213 = sbr.rel (0) target = $region33
  $region32: #{mixed_contrastive_forward.1} parent=0 // pred_region
    _
  $region33: #{mixed_contrastive_forward.1} parent=0 // pred_fallthru
    _
  // Predicated region
  $region34: #{mixed_contrastive_forward.1} parent=0 // pred_check
    _
  $region35: #{mixed_contrastive_forward.1} parent=0 // pred_check_branch
    %215 = sbr.rel (0) target = $region37
  $region36: #{mixed_contrastive_forward.1} parent=0 // pred_region
    _
  $region37: #{mixed_contrastive_forward.1} parent=0 // pred_fallthru
    _
  // Predicated region
  $region38: #{mixed_contrastive_forward.1} parent=0 // pred_check
    _
  $region39: #{mixed_contrastive_forward.1} parent=0 // pred_check_branch
    %217 = sbr.rel (0) target = $region41
  $region40: #{mixed_contrastive_forward.1} parent=0 // pred_region
    _
  $region41: #{mixed_contrastive_forward.1} parent=0 // pred_fallthru
    _

</llo_original>
